<compile_context>
chip_gen: v7x
topology: tpu7x:2x2x1
jax: 0.10.0
libtpu: 0.0.40
codegen_flags: <defaults>
</compile_context>

<pallas_src>
import functools
import math

import jax
import jax.numpy as jnp
from jax import lax
from jax.experimental import pallas as pl
from jax.experimental.pallas import tpu as pltpu

NU = 5.0        # Student-t dof for the baked-in m_estimation_function
N_ITER = 30
TOL = 1e-6
NS_ITERS = 8    # Newton-Schulz steps for the in-kernel inverse sqrtm


def _sum_last2(x):
    """Sum over the last two axes, keepdims, as two single-axis reductions."""
    return jnp.sum(jnp.sum(x, axis=-1, keepdims=True), axis=-2, keepdims=True)


def _mestimation_kernel(xt_ref, x_ref, sigma_ref, *, p, n, nu, n_iter, tol,
                        ns_iters):
    """Fused M-estimation for one packed batch block.

    xt_ref    : (Bt, p, n)  centered data, transposed (features x samples)
    x_ref     : (Bt, n, p)  centered data (samples x features)
    sigma_ref : (Bt, p, p)  output: M-estimated covariance
    """
    xt = xt_ref[...]                               # (Bt, p, n) f32, resident
    x = x_ref[...]                                 # (Bt, n, p) f32, resident
    bt = xt.shape[0]

    # bf16 MXU-operand copies, hoisted once (f32 accumulation at the matmuls).
    xt_mx = xt.astype(jnp.bfloat16)
    x_mx = x.astype(jnp.bfloat16)

    # Identity built from 2-D iota (Mosaic-friendly), hoisted once.
    row = lax.broadcasted_iota(jnp.int32, (p, p), 0)
    col = lax.broadcasted_iota(jnp.int32, (p, p), 1)
    eye = (row == col).astype(jnp.float32)
    eye_b = jnp.broadcast_to(eye[None, :, :], (bt, p, p))
    eye15 = 1.5 * eye_b                            # hoisted loop-invariant

    def bmm(a, b):                                 # (Bt,i,j)@(Bt,j,k)->(Bt,i,k)
        return jnp.einsum("bij,bjk->bik", a, b,
                          preferred_element_type=jnp.float32)

    def ns_inv_sqrtm(a):
        """Coupled Newton-Schulz: a^{-1/2} (a SPD symmetric), matmul-only, f32."""
        fro = jnp.sqrt(_sum_last2(a * a)) + jnp.float32(1e-30)   # (Bt,1,1)
        y0 = a / fro                               # eigenvalues in (0, 1]
        z0 = eye_b

        def ns_body(_, yz):
            y, z = yz
            t = eye15 - 0.5 * bmm(z, y)
            return bmm(y, t), bmm(t, z)

        # fori_loop (not a Python for) bounds vreg live ranges of the
        # 3-matmul chain; avoids spills for larger p / packed Bt.
        _, z = lax.fori_loop(0, ns_iters, ns_body, (y0, z0))
        return z * lax.rsqrt(fro)                  # ~ a^{-1/2}

    inv_n = jnp.float32(1.0 / n)
    tol2 = jnp.float32(tol * tol)
    nu_p = jnp.float32(nu + p)
    nu_f = jnp.float32(nu)

    def cond_fn(carry):
        it, _, _, done = carry
        return jnp.logical_and(it < n_iter, done == 0)

    def body_fn(carry):
        it, sigma, isq, _ = carry

        # temp = Sigma^{-1/2} @ Xt                (Bt,p,n)  [MXU bf16 -> f32]
        temp = jnp.einsum("bij,bjn->bin", isq.astype(jnp.bfloat16), xt_mx,
                          preferred_element_type=jnp.float32)
        # per-sample quadratic form               (Bt,1,n)  [VPU + XLU]
        quad = jnp.sum(temp * temp, axis=1, keepdims=True)
        # Student-t weights; exact divide (errors would feed back through the
        # whole fixed-point iteration).
        u = nu_p / (quad + nu_f)
        # Sigma = Xt diag(u) X / n — standard (p,n)x(n,p) MXU contraction,
        # no per-iteration transposed-RHS / XLU transpose.
        w = (xt * u).astype(jnp.bfloat16)
        sigma_raw = jnp.einsum("bin,bnj->bij", w, x_mx,
                               preferred_element_type=jnp.float32) * inv_n
        # In-kernel symmetrization: NS assumes a symmetric SPD input and the
        # bf16 operand rounding breaks exact symmetry.
        sigma_new = 0.5 * (sigma_raw + jnp.swapaxes(sigma_raw, -1, -2))
        isq_new = ns_inv_sqrtm(sigma_new)

        # Block-level relative Frobenius delta — mirrors the reference's
        # `break` (global-batch norm); here per grid block, difference
        # bounded by tol.
        diff = sigma_new - sigma
        num = jnp.sum(_sum_last2(diff * diff))
        den = jnp.sum(_sum_last2(sigma * sigma))
        done_new = (num < tol2 * den).astype(jnp.int32)
        return it + 1, sigma_new, isq_new, done_new

    init = (jnp.int32(0), eye_b, eye_b, jnp.int32(0))
    _, sigma, _, _ = lax.while_loop(cond_fn, body_fn, init)

    sigma_ref[...] = sigma


def _vmem_config():
    """(resident-block budget, vmem_limit_bytes) sized per TPU generation."""
    try:
        info = pltpu.get_tpu_info()
        cap = int(getattr(info, "vmem_capacity_bytes", 64 * 1024 * 1024))
    except Exception:  # no TPU info available at trace time -> conservative
        cap = 64 * 1024 * 1024
    if cap >= 100 * 1024 * 1024:                   # v5e / v6e: 128 MiB VMEM
        return 16 * 1024 * 1024, 96 * 1024 * 1024
    return 8 * 1024 * 1024, 48 * 1024 * 1024       # v7x: 64 MiB per TensorCore


def _pick_block_batch(B, p, n, budget_bytes, max_pack=64):
    """Largest divisor of B such that the resident block stays in budget,
    capped at B//2 so the 'parallel' grid has >= 2 steps (v7x megacore)."""
    # resident per batch element: Xt + X (f32 + bf16 copies) + ~8 (p,p) f32
    per_elem = (3 * p * n + 8 * p * p) * 4
    cap = max(1, min(max_pack, budget_bytes // max(per_elem, 1)))
    if B >= 2:
        cap = min(cap, B // 2)
    cap = max(1, cap)
    bt = 1
    for d in range(1, min(B, cap) + 1):
        if B % d == 0:
            bt = d
    return bt


def m_estimation_forward(X, n_iter=N_ITER, tol=TOL, assume_centered=False,
                         nu=NU, ns_iters=NS_ITERS):
    """JAX/Pallas equivalent of Mestimation.forward (init=None, normalize=None).

    X : (..., n_samples, n_features)
    returns : (..., n_features, n_features)
    """
    X = X.astype(jnp.float32)
    batch_dims = X.shape[:-2]
    n, p = X.shape[-2], X.shape[-1]
    B = int(math.prod(batch_dims)) if batch_dims else 1

    Xf = X.reshape((B, n, p))
    if not assume_centered:
        Xf = Xf - jnp.mean(Xf, axis=-2, keepdims=True)
    Xt = jnp.swapaxes(Xf, -1, -2)                   # (B, p, n)

    budget, vmem_limit = _vmem_config()
    Bt = _pick_block_batch(B, p, n, budget)
    grid = (B // Bt,)

    kernel = functools.partial(
        _mestimation_kernel,
        p=p, n=n, nu=float(nu), n_iter=int(n_iter), tol=float(tol),
        ns_iters=int(ns_iters),
    )

    cost = pl.CostEstimate(
        flops=int(n_iter) * B * (4 * p * p * n + int(ns_iters) * 6 * p ** 3),
        transcendentals=int(n_iter) * B * (n + 2),
        bytes_accessed=4 * B * (2 * p * n + p * p),
    )

    Sigma = pl.pallas_call(
        kernel,
        out_shape=jax.ShapeDtypeStruct((B, p, p), jnp.float32),
        grid=grid,
        in_specs=[pl.BlockSpec((Bt, p, n), lambda g: (g, 0, 0)),
                  pl.BlockSpec((Bt, n, p), lambda g: (g, 0, 0))],
        out_specs=pl.BlockSpec((Bt, p, p), lambda g: (g, 0, 0)),
        compiler_params=pltpu.CompilerParams(
            dimension_semantics=("parallel",),
            vmem_limit_bytes=int(vmem_limit)),
        cost_estimate=cost,
    )(Xt, Xf)

    # Final symmetrization (matches 0.5 * (Sigma + Sigma^T) in the reference).
    Sigma = 0.5 * (Sigma + jnp.swapaxes(Sigma, -1, -2))
    return Sigma.reshape(batch_dims + (p, p))


def _m_estimation_reference(X, n_iter=N_ITER, tol=TOL, nu=NU,
                            assume_centered=False):
    """Pure-JAX (eigh-based) reference mirroring the torch module."""
    X = X.astype(jnp.float32)
    n, p = X.shape[-2], X.shape[-1]
    batch_dims = X.shape[:-2]
    if not assume_centered:
        X = X - jnp.mean(X, axis=-2, keepdims=True)
    Sigma = jnp.broadcast_to(jnp.eye(p, dtype=jnp.float32),
                             batch_dims + (p, p))
    isq = Sigma
    for _ in range(n_iter):
        temp = jnp.einsum("...ij,...kj->...ik", isq, X)       # (..., p, n)
        quad = jnp.sum(temp * temp, axis=-2)                   # (..., n)
        u = (nu + p) / (nu + quad)
        w = jnp.swapaxes(X, -1, -2) * jnp.sqrt(u)[..., None, :]
        Sigma_new = jnp.einsum("...in,...jn->...ij", w, w) / n
        ev, V = jnp.linalg.eigh(Sigma_new)
        ev = jnp.clip(ev, 1e-12, None)
        isq = jnp.einsum("...ij,...j,...kj->...ik", V, 1.0 / jnp.sqrt(ev), V)
        delta = float(jnp.linalg.norm((Sigma_new - Sigma).ravel())
                      / jnp.linalg.norm(Sigma.ravel()))
        Sigma = Sigma_new
        if delta < tol:
            break
    return 0.5 * (Sigma + jnp.swapaxes(Sigma, -1, -2))


if __name__ == "__main__":
    key = jax.random.PRNGKey(0)
    batch, n_samples, n_features = 2, 16, 8
    X = jax.random.normal(key, (batch, n_samples, n_features),
                          dtype=jnp.float32)

    Sigma = m_estimation_forward(X)
    Sigma = jax.block_until_ready(Sigma)

    assert Sigma.shape == (batch, n_features, n_features)
    assert bool(jnp.all(jnp.isfinite(Sigma)))
    # symmetry check
    assert bool(jnp.allclose(Sigma, jnp.swapaxes(Sigma, -1, -2), atol=1e-6))

    # loose numerical check against a pure-JAX eigh-based reference
    # (loose because the kernel uses Newton-Schulz isqrtm + bf16 MXU operands)
    Sigma_ref = _m_estimation_reference(X)
    assert bool(jnp.allclose(Sigma, Sigma_ref, rtol=5e-2, atol=5e-3))

    print("KERNEL_OK")
</pallas_src>

<mosaic_0001>
module attributes {stable_mosaic.version = 11 : i64} {
  func.func @_mestimation_kernel(%arg0: i32, %arg1: memref<1x8x16xf32, #tpu.memory_space<vmem>>, %arg2: memref<1x16x8xf32, #tpu.memory_space<vmem>>, %arg3: memref<1x8x8xf32, #tpu.memory_space<vmem>>) attributes {dimension_semantics = [#tpu.dimension_semantics<parallel>], iteration_bounds = array<i64: 2>, scalar_prefetch = 0 : i64, scratch_operands = 0 : i64, tpu.core_type = #tpu.core_type<tc>, window_params = [{transform_indices = @transform_0, window_bounds = array<i64: 1, 8, 16>}, {transform_indices = @transform_1, window_bounds = array<i64: 1, 16, 8>}, {transform_indices = @transform_2, window_bounds = array<i64: 1, 8, 8>}]} {
    %c0 = arith.constant 0 : index
    %c0_0 = arith.constant 0 : index
    %c0_1 = arith.constant 0 : index
    %0 = vector.load %arg1[%c0, %c0_0, %c0_1] : memref<1x8x16xf32, #tpu.memory_space<vmem>>, vector<1x8x16xf32>
    %c0_2 = arith.constant 0 : index
    %c0_3 = arith.constant 0 : index
    %c0_4 = arith.constant 0 : index
    %1 = vector.load %arg2[%c0_2, %c0_3, %c0_4] : memref<1x16x8xf32, #tpu.memory_space<vmem>>, vector<1x16x8xf32>
    %2 = arith.truncf %0 : vector<1x8x16xf32> to vector<1x8x16xbf16>
    %3 = arith.truncf %1 : vector<1x16x8xf32> to vector<1x16x8xbf16>
    %4 = tpu.iota {dimensions = array<i32: 0>} : vector<8x8xi32>
    %5 = tpu.iota {dimensions = array<i32: 1>} : vector<8x8xi32>
    %6 = arith.cmpi eq, %4, %5 : vector<8x8xi32>
    %7 = arith.extui %6 : vector<8x8xi1> to vector<8x8xi32>
    %8 = arith.sitofp %7 : vector<8x8xi32> to vector<8x8xf32>
    %9 = vector.shape_cast %8 : vector<8x8xf32> to vector<1x8x8xf32>
    %cst = arith.constant 1.500000e+00 : f32
    %10 = vector.broadcast %cst : f32 to vector<1x8x8xf32>
    %11 = arith.mulf %10, %9 : vector<1x8x8xf32>
    %cst_5 = arith.constant 5.000000e+00 : f32
    %cst_6 = arith.constant 1.300000e+01 : f32
    %cst_7 = arith.constant 6.250000e-02 : f32
    %cst_8 = arith.constant 9.99999996E-13 : f32
    %c0_i32 = arith.constant 0 : i32
    %c0_i32_9 = arith.constant 0 : i32
    %12:4 = scf.while (%arg4 = %c0_i32, %arg5 = %9, %arg6 = %9, %arg7 = %c0_i32_9) : (i32, vector<1x8x8xf32>, vector<1x8x8xf32>, i32) -> (i32, vector<1x8x8xf32>, vector<1x8x8xf32>, i32) {
      %c30_i32 = arith.constant 30 : i32
      %14 = arith.cmpi slt, %arg4, %c30_i32 : i32
      %c0_i32_13 = arith.constant 0 : i32
      %15 = arith.cmpi eq, %arg7, %c0_i32_13 : i32
      %16 = arith.andi %14, %15 : i1
      scf.condition(%16) %arg4, %arg5, %arg6, %arg7 : i32, vector<1x8x8xf32>, vector<1x8x8xf32>, i32
    } do {
    ^bb0(%arg4: i32, %arg5: vector<1x8x8xf32>, %arg6: vector<1x8x8xf32>, %arg7: i32):
      %14 = arith.truncf %arg6 : vector<1x8x8xf32> to vector<1x8x8xbf16>
      "tpu.trace_start"() <{level = 10 : i32, message = "bij,bjn->bin"}> : () -> ()
      %cst_13 = arith.constant dense<0.000000e+00> : vector<1x8x16xf32>
      %15 = tpu.matmul %14, %2, %cst_13 {dimension_numbers = #tpu.dot_dimension_numbers<[2], [1], [1], [2], [0, 0, 0, 1, 1, 2], [0], [0]>} : vector<1x8x8xbf16>, vector<1x8x16xbf16>, vector<1x8x16xf32> -> vector<1x8x16xf32>
      "tpu.trace_stop"() : () -> ()
      %16 = arith.mulf %15, %15 : vector<1x8x16xf32>
      %cst_14 = arith.constant dense<0.000000e+00> : vector<1x16xf32>
      %17 = vector.multi_reduction <add>, %16, %cst_14 [1] : vector<1x8x16xf32> to vector<1x16xf32>
      %18 = vector.shape_cast %17 : vector<1x16xf32> to vector<1x1x16xf32>
      %19 = vector.broadcast %cst_5 : f32 to vector<1x1x16xf32>
      %20 = arith.addf %18, %19 : vector<1x1x16xf32>
      %21 = vector.broadcast %cst_6 : f32 to vector<1x1x16xf32>
      %22 = arith.divf %21, %20 : vector<1x1x16xf32>
      %23 = vector.broadcast %22 : vector<1x1x16xf32> to vector<1x8x16xf32>
      %24 = arith.mulf %0, %23 : vector<1x8x16xf32>
      %25 = arith.truncf %24 : vector<1x8x16xf32> to vector<1x8x16xbf16>
      "tpu.trace_start"() <{level = 10 : i32, message = "bin,bnj->bij"}> : () -> ()
      %cst_15 = arith.constant dense<0.000000e+00> : vector<1x8x8xf32>
      %26 = tpu.matmul %25, %3, %cst_15 {dimension_numbers = #tpu.dot_dimension_numbers<[2], [1], [1], [2], [0, 0, 0, 1, 1, 2], [0], [0]>} : vector<1x8x16xbf16>, vector<1x16x8xbf16>, vector<1x8x8xf32> -> vector<1x8x8xf32>
      "tpu.trace_stop"() : () -> ()
      %27 = vector.broadcast %cst_7 : f32 to vector<1x8x8xf32>
      %28 = arith.mulf %26, %27 : vector<1x8x8xf32>
      %29 = tpu.transpose %28, [0, 2, 1] : vector<1x8x8xf32> -> vector<1x8x8xf32>
      %30 = arith.addf %28, %29 : vector<1x8x8xf32>
      %cst_16 = arith.constant 5.000000e-01 : f32
      %31 = vector.broadcast %cst_16 : f32 to vector<1x8x8xf32>
      %32 = arith.mulf %31, %30 : vector<1x8x8xf32>
      %33 = arith.mulf %32, %32 : vector<1x8x8xf32>
      %cst_17 = arith.constant dense<0.000000e+00> : vector<1x8xf32>
      %34 = vector.multi_reduction <add>, %33, %cst_17 [2] : vector<1x8x8xf32> to vector<1x8xf32>
      %35 = vector.shape_cast %34 : vector<1x8xf32> to vector<1x8x1xf32>
      %cst_18 = arith.constant dense<0.000000e+00> : vector<1x1xf32>
      %36 = vector.multi_reduction <add>, %35, %cst_18 [1] : vector<1x8x1xf32> to vector<1x1xf32>
      %37 = vector.shape_cast %36 : vector<1x1xf32> to vector<1x1x1xf32>
      %38 = math.sqrt %37 : vector<1x1x1xf32>
      %cst_19 = arith.constant 1.000000e-30 : f32
      %39 = vector.broadcast %cst_19 : f32 to vector<1x1x1xf32>
      %40 = arith.addf %38, %39 : vector<1x1x1xf32>
      %41 = vector.broadcast %40 : vector<1x1x1xf32> to vector<1x8x8xf32>
      %42 = arith.divf %32, %41 : vector<1x8x8xf32>
      %c0_i32_20 = arith.constant 0 : i32
      %c8_i32 = arith.constant 8 : i32
      %43 = arith.addi %c0_i32_20, %c8_i32 : i32
      %c1_i32 = arith.constant 1 : i32
      %44:2 = scf.for %arg8 = %c0_i32_20 to %43 step %c1_i32 iter_args(%arg9 = %42, %arg10 = %9) -> (vector<1x8x8xf32>, vector<1x8x8xf32>)  : i32 {
        "tpu.trace_start"() <{level = 10 : i32, message = "bij,bjk->bik"}> : () -> ()
        %cst_29 = arith.constant dense<0.000000e+00> : vector<1x8x8xf32>
        %71 = tpu.matmul %arg10, %arg9, %cst_29 {dimension_numbers = #tpu.dot_dimension_numbers<[2], [1], [1], [2], [0, 0, 0, 1, 1, 2], [0], [0]>} : vector<1x8x8xf32>, vector<1x8x8xf32>, vector<1x8x8xf32> -> vector<1x8x8xf32>
        "tpu.trace_stop"() : () -> ()
        %cst_30 = arith.constant 5.000000e-01 : f32
        %72 = vector.broadcast %cst_30 : f32 to vector<1x8x8xf32>
        %73 = arith.mulf %72, %71 : vector<1x8x8xf32>
        %74 = arith.subf %11, %73 : vector<1x8x8xf32>
        "tpu.trace_start"() <{level = 10 : i32, message = "bij,bjk->bik"}> : () -> ()
        %cst_31 = arith.constant dense<0.000000e+00> : vector<1x8x8xf32>
        %75 = tpu.matmul %arg9, %74, %cst_31 {dimension_numbers = #tpu.dot_dimension_numbers<[2], [1], [1], [2], [0, 0, 0, 1, 1, 2], [0], [0]>} : vector<1x8x8xf32>, vector<1x8x8xf32>, vector<1x8x8xf32> -> vector<1x8x8xf32>
        %cst_32 = arith.constant dense<0.000000e+00> : vector<1x8x8xf32>
        %76 = tpu.matmul %74, %arg10, %cst_32 {dimension_numbers = #tpu.dot_dimension_numbers<[2], [1], [1], [2], [0, 0, 0, 1, 1, 2], [0], [0]>} : vector<1x8x8xf32>, vector<1x8x8xf32>, vector<1x8x8xf32> -> vector<1x8x8xf32>
        "tpu.trace_stop"() : () -> ()
        scf.yield %75, %76 : vector<1x8x8xf32>, vector<1x8x8xf32>
      }
      %c8_i32_21 = arith.constant 8 : i32
      %45 = math.rsqrt %40 : vector<1x1x1xf32>
      %46 = vector.broadcast %45 : vector<1x1x1xf32> to vector<1x8x8xf32>
      %47 = arith.mulf %44#1, %46 : vector<1x8x8xf32>
      %48 = arith.subf %32, %arg5 : vector<1x8x8xf32>
      %49 = arith.mulf %48, %48 : vector<1x8x8xf32>
      %cst_22 = arith.constant dense<0.000000e+00> : vector<1x8xf32>
      %50 = vector.multi_reduction <add>, %49, %cst_22 [2] : vector<1x8x8xf32> to vector<1x8xf32>
      %51 = vector.shape_cast %50 : vector<1x8xf32> to vector<1x8x1xf32>
      %cst_23 = arith.constant dense<0.000000e+00> : vector<1x1xf32>
      %52 = vector.multi_reduction <add>, %51, %cst_23 [1] : vector<1x8x1xf32> to vector<1x1xf32>
      %53 = vector.shape_cast %52 : vector<1x1xf32> to vector<1x1x1xf32>
      %54 = vector.shape_cast %53 : vector<1x1x1xf32> to vector<1x1x1x1xf32>
      %cst_24 = arith.constant dense<0.000000e+00> : vector<1xf32>
      %55 = vector.multi_reduction <add>, %54, %cst_24 [1, 2, 3] : vector<1x1x1x1xf32> to vector<1xf32>
      %56 = vector.shape_cast %55 : vector<1xf32> to vector<1x1x1x1xf32>
      %57 = vector.extract %56[0, 0, 0, 0] : f32 from vector<1x1x1x1xf32>
      %58 = arith.mulf %arg5, %arg5 : vector<1x8x8xf32>
      %cst_25 = arith.constant dense<0.000000e+00> : vector<1x8xf32>
      %59 = vector.multi_reduction <add>, %58, %cst_25 [2] : vector<1x8x8xf32> to vector<1x8xf32>
      %60 = vector.shape_cast %59 : vector<1x8xf32> to vector<1x8x1xf32>
      %cst_26 = arith.constant dense<0.000000e+00> : vector<1x1xf32>
      %61 = vector.multi_reduction <add>, %60, %cst_26 [1] : vector<1x8x1xf32> to vector<1x1xf32>
      %62 = vector.shape_cast %61 : vector<1x1xf32> to vector<1x1x1xf32>
      %63 = vector.shape_cast %62 : vector<1x1x1xf32> to vector<1x1x1x1xf32>
      %cst_27 = arith.constant dense<0.000000e+00> : vector<1xf32>
      %64 = vector.multi_reduction <add>, %63, %cst_27 [1, 2, 3] : vector<1x1x1x1xf32> to vector<1xf32>
      %65 = vector.shape_cast %64 : vector<1xf32> to vector<1x1x1x1xf32>
      %66 = vector.extract %65[0, 0, 0, 0] : f32 from vector<1x1x1x1xf32>
      %67 = arith.mulf %cst_8, %66 : f32
      %68 = arith.cmpf olt, %57, %67 : f32
      %69 = arith.extui %68 : i1 to i32
      %c1_i32_28 = arith.constant 1 : i32
      %70 = arith.addi %arg4, %c1_i32_28 : i32
      scf.yield %70, %32, %47, %69 : i32, vector<1x8x8xf32>, vector<1x8x8xf32>, i32
    }
    %c0_10 = arith.constant 0 : index
    %c0_11 = arith.constant 0 : index
    %c0_12 = arith.constant 0 : index
    %13 = vector.load %arg3[%c0_10, %c0_11, %c0_12] : memref<1x8x8xf32, #tpu.memory_space<vmem>>, vector<1x8x8xf32>
    tpu.vector_store %arg3[%c0_10, %c0_11, %c0_12], %12#1 {strides = array<i32>} : memref<1x8x8xf32, #tpu.memory_space<vmem>>, vector<1x8x8xf32>,
    return
  }
  func.func @transform_0(%arg0: i32) -> (i32, i32, i32) {
    %c0_i32 = arith.constant 0 : i32
    %c0_i32_0 = arith.constant 0 : i32
    %c0_i32_1 = arith.constant 0 : i32
    return %arg0, %c0_i32, %c0_i32_0 : i32, i32, i32
  }
  func.func @transform_1(%arg0: i32) -> (i32, i32, i32) {
    %c0_i32 = arith.constant 0 : i32
    %c0_i32_0 = arith.constant 0 : i32
    %c0_i32_1 = arith.constant 0 : i32
    return %arg0, %c0_i32, %c0_i32_0 : i32, i32, i32
  }
  func.func @transform_2(%arg0: i32) -> (i32, i32, i32) {
    %c0_i32 = arith.constant 0 : i32
    %c0_i32_0 = arith.constant 0 : i32
    %c0_i32_1 = arith.constant 0 : i32
    return %arg0, %c0_i32, %c0_i32_0 : i32, i32, i32
  }
}

</mosaic_0001>

<llo_original>
// kernel: tpu_custom_call.1
$region0: #{tpu_custom_call.1}
  #allocation0 [shape = 'u32[]', space=smem, size = 0x4, offset = 0x4, fixed_abs, tag = 'smem constant byte address 0x4 - core index']
  #allocation1 [shape = 'u32[144,128]{1,0:T(1,128)}', space=vmem, size = 0x12000, scoped, tag = 'internal scratch']
  %s0 = inlined_call_operand.vmem [shape: f32[2,8,16], index: 0, kind: input, shape index: {}]
  %s1 = inlined_call_operand.vmem [shape: f32[2,16,8], index: 1, kind: input, shape index: {}]
  %s2 = inlined_call_operand.hbm [shape: f32[2,8,8], index: 2, kind: output, shape index: {}]
  %s3 = sld [smem:[#allocation0]]
  $region55: #{tpu_custom_call.1} parent=0
    _
  %s5 = ssub.s32 1, %s3
  %s6 = scalar_select 0, %s5, %s3
  $region1: #{tpu_custom_call.1} parent=0
    #allocation2 [shape = 'u8[8192]{0}', space=vmem, size = 0x2000, scoped, tag = 'output window, operand 0']
    #allocation3 [shape = 's32[2]{0}', space=sflag, size = 0x8, scoped, tag = 'scoped memory for tpu_custom_call.1']
    %7 = vsyncpa [#allocation3], 0
    %s8 = scalar_lea.sflag [#allocation3], 1
    %9 = vsyncpa %s8, 0
    loop: start=0, step=1, limit=4
    $region2: #{tpu_custom_call.1} parent=1 // loop_pre_header
      _
    $region3: #{tpu_custom_call.1} parent=1 // loop_header
      %s11 = sphi 0, %s15
      %p12 = scmp.ge.s32.totalorder %s11, 4
      %s21 = sphi 0, %s23
      %s24 = sphi 0, %s21
      %s25 = sphi 0, %s24
      %s41 = sphi 0, %s25
      %s47 = sphi 0, %s49
      %s50 = sphi 0, %s47
      %s51 = sphi 0, %s50
      %s67 = sphi 0, %s51
      %s73 = sphi 0, %s75
      %s76 = sphi 0, %s73
      %s77 = sphi 0, %s76
      %s93 = sphi 0, %s77
    $region4: #{tpu_custom_call.1} parent=1 // loop_header_branch
      %14 = sbr.rel (%p12) target = $region8
    $region5: #{tpu_custom_call.1} parent=1 // loop_body
      %s16 = ssub.s32 %s11, 1
      %s17 = ssub.s32 %s11, 2
      %s18 = sadd.s32 %s11, 1
      %s19 = ssub.s32 %s11, %s18
      %p20 = scmp.eq.s32.totalorder %s19, 0
      %s22 = sadd.s32 %s21, 1
      %s23 = scalar_select %p20, %s21, %s22
      %p26 = pneg %p20
      %p27 = scmp.eq.s32.totalorder %s11, 1
      %p28 = por %p26, %p27
      %p29 = scmp.ne.s32.totalorder %s21, %s24
      %p30 = scmp.eq.s32.totalorder %s11, 0
      %p31 = por %p29, %p30
      %p32 = scmp.ne.s32.totalorder %s21, %s24
      %p33 = scmp.eq.s32.totalorder %s16, 1
      %p34 = por %p32, %p33
      %p35 = scmp.ne.s32.totalorder %s24, %s25
      %p36 = scmp.eq.s32.totalorder %s16, 0
      %p37 = por %p35, %p36
      %p38 = scmp.ne.s32.totalorder %s24, %s25
      %p39 = scmp.eq.s32.totalorder %s17, 1
      %p40 = por %p38, %p39
      %p42 = scmp.ne.s32.totalorder %s25, %s41
      %p43 = scmp.eq.s32.totalorder %s17, 0
      %p44 = por %p42, %p43
      %s45 = ssub.s32 %s11, %s18
      %p46 = scmp.eq.s32.totalorder %s45, 0
      %s48 = sadd.s32 %s47, 1
      %s49 = scalar_select %p46, %s47, %s48
      %p52 = pneg %p46
      %p53 = scmp.eq.s32.totalorder %s11, 1
      %p54 = por %p52, %p53
      %p55 = scmp.ne.s32.totalorder %s47, %s50
      %p56 = scmp.eq.s32.totalorder %s11, 0
      %p57 = por %p55, %p56
      %p58 = scmp.ne.s32.totalorder %s47, %s50
      %p59 = scmp.eq.s32.totalorder %s16, 1
      %p60 = por %p58, %p59
      %p61 = scmp.ne.s32.totalorder %s50, %s51
      %p62 = scmp.eq.s32.totalorder %s16, 0
      %p63 = por %p61, %p62
      %p64 = scmp.ne.s32.totalorder %s50, %s51
      %p65 = scmp.eq.s32.totalorder %s17, 1
      %p66 = por %p64, %p65
      %p68 = scmp.ne.s32.totalorder %s51, %s67
      %p69 = scmp.eq.s32.totalorder %s17, 0
      %p70 = por %p68, %p69
      %s71 = ssub.s32 %s11, %s18
      %p72 = scmp.eq.s32.totalorder %s71, 0
      %s74 = sadd.s32 %s73, 1
      %s75 = scalar_select %p72, %s73, %s74
      %p78 = pneg %p72
      %p79 = scmp.eq.s32.totalorder %s11, 1
      %p80 = por %p78, %p79
      %p81 = scmp.ne.s32.totalorder %s73, %s76
      %p82 = scmp.eq.s32.totalorder %s11, 0
      %p83 = por %p81, %p82
      %p84 = scmp.ne.s32.totalorder %s73, %s76
      %p85 = scmp.eq.s32.totalorder %s16, 1
      %p86 = por %p84, %p85
      %p87 = scmp.ne.s32.totalorder %s76, %s77
      %p88 = scmp.eq.s32.totalorder %s16, 0
      %p89 = por %p87, %p88
      %p90 = scmp.ne.s32.totalorder %s76, %s77
      %p91 = scmp.eq.s32.totalorder %s17, 1
      %p92 = por %p90, %p91
      %p94 = scmp.ne.s32.totalorder %s77, %s93
      %p95 = scmp.eq.s32.totalorder %s17, 0
      %p96 = por %p94, %p95
      %p97 = scmp.le.s32.totalorder 1, %s11
      %p98 = scmp.lt.s32.totalorder %s11, 3
      %p99 = pnand %p97, %p98
      %p100 = pneg %p99
      // Predicated region
      $region9: #{tpu_custom_call.1} parent=5 // pred_check
        _
      $region10: #{tpu_custom_call.1} parent=5 // pred_check_branch
        %102 = sbr.rel (%p99) target = $region12
      $region11: #{tpu_custom_call.1} parent=5 // pred_region
        %s103 = ssub.s32 %s11, 1
      $region12: #{tpu_custom_call.1} parent=5 // pred_fallthru
        _
      %p104 = scmp.lt.s32.totalorder %s11, 2
      // Predicated region
      $region13: #{tpu_custom_call.1} parent=5 // pred_check
        %p105 = pneg %p104
      $region14: #{tpu_custom_call.1} parent=5 // pred_check_branch
        %107 = sbr.rel (%p105) target = $region16
      $region15: #{tpu_custom_call.1} parent=5 // pred_region
        // Predicated region
        $region17: #{tpu_custom_call.1} parent=15 // pred_check
          %p108 = pneg %p31
        $region18: #{tpu_custom_call.1} parent=15 // pred_check_branch
          %110 = sbr.rel (%p108) target = $region20
        $region19: #{tpu_custom_call.1} parent=15 // pred_region
          %p111 = scmp.lt.s32.totalorder %s11, 1
          %s112 = scalar_select %p111, %s11, 1
          %s113 = smul.addr %s112, 8
          %s114 = scalar_lea.vmem %s0, %s113
        $region20: #{tpu_custom_call.1} parent=15 // pred_fallthru
          _
        // Predicated region
        $region21: #{tpu_custom_call.1} parent=15 // pred_check
          %p115 = pneg %p57
        $region22: #{tpu_custom_call.1} parent=15 // pred_check_branch
          %117 = sbr.rel (%p115) target = $region24
        $region23: #{tpu_custom_call.1} parent=15 // pred_region
          %p118 = scmp.lt.s32.totalorder %s11, 1
          %s119 = scalar_select %p118, %s11, 1
          %s120 = smul.addr %s119, 2
          %s121 = smul.addr %s120, 8
          %s122 = scalar_lea.vmem %s1, %s121
        $region24: #{tpu_custom_call.1} parent=15 // pred_fallthru
          _
      $region16: #{tpu_custom_call.1} parent=5 // pred_fallthru
        _
      %p123 = scmp.le.s32.totalorder 1, %s11
      %p124 = scmp.lt.s32.totalorder %s11, 3
      %p125 = pnand %p123, %p124
      %p126 = pneg %p125
      // Predicated region
      $region25: #{tpu_custom_call.1} parent=5 // pred_check
        _
      $region26: #{tpu_custom_call.1} parent=5 // pred_check_branch
        %128 = sbr.rel (%p125) target = $region28
      $region27: #{tpu_custom_call.1} parent=5 // pred_region
        %s129 = ssub.s32 %s11, 1
        %p130 = scmp.lt.s32.totalorder %s16, 1
        %s131 = scalar_select %p130, %s16, 1
        %s132 = smul.addr %s131, 8
        %s133 = scalar_lea.vmem %s0, %s132
        %p134 = pneg %p37
        %p135 = pneg %p34
        %p136 = scmp.lt.s32.totalorder %s16, 1
        %s137 = scalar_select %p136, %s16, 1
        %s138 = smul.addr %s137, 2
        %s139 = smul.addr %s138, 8
        %s140 = scalar_lea.vmem %s1, %s139
        %p141 = pneg %p63
        %p142 = pneg %p60
        %p143 = pneg %p89
        %p144 = pneg %p86
        %s145 = sand.u32 %s76, 1
        %s146 = scalar_lea.sflag [#allocation3], %s145
        %s147 = sand.u32 %s76, 1
        %s148 = smul.addr %s147, 8
        %s149 = scalar_lea.vmem [#allocation2], %s148
        %p150 = scmp.lt.s32.totalorder %s16, 1
        %s151 = scalar_select %p150, %s16, 1
        %s152 = smul.addr %s151, 8
        %s153 = scalar_lea.vmem %s0, %s152
        %p154 = scmp.lt.s32.totalorder %s16, 1
        %s155 = scalar_select %p154, %s16, 1
        %s156 = smul.addr %s155, 2
        %s157 = smul.addr %s156, 8
        %s158 = scalar_lea.vmem %s1, %s157
        %v160 = vld [vmem:[%s153] sm:$0xff]
        %v161 = vld [vmem:[%s158] sm:$0xff]
        %v162 = vld [vmem:[%s158 + $0x8] sm:$0xff]
        %v163 = vpack.c.bf16 %v160, %v160
        %v164 = vpack.c.bf16 %v162, %v161
        %v165 = vlaneseq
        %v166 = vshrl.u32 %v165, 7
        %v167 = vlaneseq
        %v168 = vand.u32 %v167, 127
        %vm169 = vcmp.eq.s32.totalorder %v166, %v168
        %v170 = vsel %vm169, 1, 0
        %v171 = vcvt.s32.f32 %v170
        %v172 = vmul.f32 %v171, 1.5
        // While loop
        $region29: #{tpu_custom_call.1} parent=27 // loop_pre_header
          _
        $region30: #{tpu_custom_call.1} parent=27 // loop_header
          %s174 = sphi 0, %s604
          %v175 = vphi %v171, %v324
          %v176 = vphi %v171, %v575
          %s177 = sphi 0, %s603
          %p178 = scmp.lt.s32.totalorder %s174, 30
          %p179 = scmp.eq.s32.totalorder %s177, 0
          %p180 = pnand %p178, %p179
          %p181 = pneg %p180
        $region31: #{tpu_custom_call.1} parent=27 // loop_header_branch
          %183 = sbr.rel (%p180) target = $region35
        $region32: #{tpu_custom_call.1} parent=27 // loop_body
          %v184 = vpack.c.bf16 %v176, %v176
          %vm185 = vcmask 64512
          %v187 = vsel %vm185, %v184, 0
          %vm189 = vcmask 1043456
          %v191 = vsel %vm189, %v163, 0
          %193 = vmatprep.subr.bf16.mxu0 0
          %194 = vmatpush1.bf16.msra.mxu0 %v191
          %195 = vmatprep.subr.bf16.mxu0 0
          %196 = vmatpush1.bf16.msra.mxu0 0
          %197 = vmatprep.subr.bf16.mxu0 0
          %198 = vmatpush1.bf16.msra.mxu0 0
          %199 = vmatprep.subr.bf16.mxu0 0
          %200 = vmatpush1.bf16.msra.mxu0 0
          %201 = vmatprep.subr.bf16.mxu0 0
          %202 = vmatpush1.bf16.msra.mxu0 0
          %203 = vmatprep.subr.bf16.mxu0 0
          %204 = vmatpush1.bf16.msra.mxu0 0
          %205 = vmatprep.subr.bf16.mxu0 0
          %206 = vmatpush1.bf16.msra.mxu0 0
          %207 = vmatprep.subr.bf16.mxu0 0
          %208 = vmatpush1.bf16.msra.mxu0 0
          %209 = vmatprep.subr.bf16.mxu0 0
          %210 = vmatpush1.bf16.msra.mxu0 0
          %211 = vmatprep.subr.bf16.mxu0 0
          %212 = vmatpush1.bf16.msra.mxu0 0
          %213 = vmatprep.subr.bf16.mxu0 0
          %214 = vmatpush1.bf16.msra.mxu0 0
          %215 = vmatprep.subr.bf16.mxu0 0
          %216 = vmatpush1.bf16.msra.mxu0 0
          %217 = vmatprep.subr.bf16.mxu0 0
          %218 = vmatpush1.bf16.msra.mxu0 0
          %219 = vmatprep.subr.bf16.mxu0 0
          %220 = vmatpush1.bf16.msra.mxu0 0
          %221 = vmatprep.subr.bf16.mxu0 0
          %222 = vmatpush1.bf16.msra.mxu0 0
          %223 = vmatprep.subr.bf16.mxu0 0
          %224 = vmatpush1.bf16.msra.mxu0 0
          %225 = vmatprep.mubr.bf16.mxu0 0
          %226 = vmatmul.mubr.bf16.gmra.mrb[0].mxu0 %v187
          %v227 = vpop.f32.mrb[0].mxu0
          %v228 = vadd.f32 0.0, %v227
          %v229 = vpop.f32.mrb[0].mxu0
          %v230 = vpop.f32.mrb[0].mxu0
          %v231 = vpop.f32.mrb[0].mxu0
          %232 = vdwg.mxu0
          %v233 = vmul.f32 %v228, %v228
          %vm234 = vcmask 130048
          %v235 = vsel %vm234, %v233, 0.0
          %v236 = vrot.slane %v235, 4
          %v237 = vadd.f32 %v235, %v236
          %v238 = vrot.slane %v237, 2
          %v239 = vadd.f32 %v237, %v238
          %v240 = vrot.slane %v239, 1
          %v241 = vadd.f32 %v239, %v240
          %v242 = vadd.f32 %v241, 5.0
          %v243 = vrcp.pop %v242
          %v244 = vmul.f32 13.0, %v243
          %v245 = vmul.f32 %v160, %v244
          %v246 = vpack.c.bf16 %v245, %v245
          %v248 = vsel %vm234, %v246, 0
          %250 = vmatprep.subr.bf16.mxu0 0
          %251 = vmatpush1.bf16.msra.mxu0 %v164
          %252 = vmatprep.subr.bf16.mxu0 0
          %253 = vmatpush1.bf16.msra.mxu0 0
          %254 = vmatprep.subr.bf16.mxu0 0
          %255 = vmatpush1.bf16.msra.mxu0 0
          %256 = vmatprep.subr.bf16.mxu0 0
          %257 = vmatpush1.bf16.msra.mxu0 0
          %258 = vmatprep.subr.bf16.mxu0 0
          %259 = vmatpush1.bf16.msra.mxu0 0
          %260 = vmatprep.subr.bf16.mxu0 0
          %261 = vmatpush1.bf16.msra.mxu0 0
          %262 = vmatprep.subr.bf16.mxu0 0
          %263 = vmatpush1.bf16.msra.mxu0 0
          %264 = vmatprep.subr.bf16.mxu0 0
          %265 = vmatpush1.bf16.msra.mxu0 0
          %266 = vmatprep.subr.bf16.mxu0 0
          %267 = vmatpush1.bf16.msra.mxu0 0
          %268 = vmatprep.subr.bf16.mxu0 0
          %269 = vmatpush1.bf16.msra.mxu0 0
          %270 = vmatprep.subr.bf16.mxu0 0
          %271 = vmatpush1.bf16.msra.mxu0 0
          %272 = vmatprep.subr.bf16.mxu0 0
          %273 = vmatpush1.bf16.msra.mxu0 0
          %274 = vmatprep.subr.bf16.mxu0 0
          %275 = vmatpush1.bf16.msra.mxu0 0
          %276 = vmatprep.subr.bf16.mxu0 0
          %277 = vmatpush1.bf16.msra.mxu0 0
          %278 = vmatprep.subr.bf16.mxu0 0
          %279 = vmatpush1.bf16.msra.mxu0 0
          %280 = vmatprep.subr.bf16.mxu0 0
          %281 = vmatpush1.bf16.msra.mxu0 0
          %282 = vmatprep.mubr.bf16.mxu0 0
          %283 = vmatmul.mubr.bf16.gmra.mrb[0].mxu0 %v248
          %v284 = vpop.f32.mrb[0].mxu0
          %v285 = vadd.f32 0.0, %v284
          %v286 = vpop.f32.mrb[0].mxu0
          %v287 = vpop.f32.mrb[0].mxu0
          %v288 = vpop.f32.mrb[0].mxu0
          %289 = vdwg.mxu0
          %v290 = vmul.f32 %v285, 0.0625
          %291 = vxpose.xlu0.b32.start [1/16] %v290, 128
          %292 = vxpose.xlu0.b32.cont [2/16] 0.0, 128
          %293 = vxpose.xlu0.b32.cont [3/16] 0.0, 128
          %294 = vxpose.xlu0.b32.cont [4/16] 0.0, 128
          %295 = vxpose.xlu0.b32.cont [5/16] 0.0, 128
          %296 = vxpose.xlu0.b32.cont [6/16] 0.0, 128
          %297 = vxpose.xlu0.b32.cont [7/16] 0.0, 128
          %298 = vxpose.xlu0.b32.cont [8/16] 0.0, 128
          %299 = vxpose.xlu0.b32.cont [9/16] 0.0, 128
          %300 = vxpose.xlu0.b32.cont [10/16] 0.0, 128
          %301 = vxpose.xlu0.b32.cont [11/16] 0.0, 128
          %302 = vxpose.xlu0.b32.cont [12/16] 0.0, 128
          %303 = vxpose.xlu0.b32.cont [13/16] 0.0, 128
          %304 = vxpose.xlu0.b32.cont [14/16] 0.0, 128
          %305 = vxpose.xlu0.b32.cont [15/16] 0.0, 128
          %306 = vxpose.xlu0.b32.end [16/16] 0.0, 128
          %v307 = vpop.trf.xlu0
          %v308 = vpop.trf.xlu0
          %v309 = vpop.trf.xlu0
          %v310 = vpop.trf.xlu0
          %v311 = vpop.trf.xlu0
          %v312 = vpop.trf.xlu0
          %v313 = vpop.trf.xlu0
          %v314 = vpop.trf.xlu0
          %v315 = vpop.trf.xlu0
          %v316 = vpop.trf.xlu0
          %v317 = vpop.trf.xlu0
          %v318 = vpop.trf.xlu0
          %v319 = vpop.trf.xlu0
          %v320 = vpop.trf.xlu0
          %v321 = vpop.trf.xlu0
          %v322 = vpop.trf.xlu0
          %v323 = vadd.f32 %v290, %v307
          %v324 = vmul.f32 %v323, 0.5
          %v325 = vmul.f32 %v324, %v324
          %v326 = vsel %vm185, %v325, 0.0
          %327 = vadd.xlane.f32.xlu0 %v326
          %v328 = vpop.xlane.xlu0 %327
          %v329 = vrot.slane %v328, 4
          %v330 = vadd.f32 %v328, %v329
          %v331 = vrot.slane %v330, 2
          %v332 = vadd.f32 %v330, %v331
          %v333 = vrot.slane %v332, 1
          %v334 = vadd.f32 %v332, %v333
          %v335 = vrsqrt.pop %v334
          %v336 = vmul.f32 %v334, %v335
          %vm337 = vcmp.eq.f32.partialorder %v334, inf
          %v338 = vsel %vm337, %v334, %v336
          %vm339 = vcmp.eq.f32.partialorder %v334, 0.0
          %v340 = vand.u32 %v334, 2147483648
          %v341 = vsel %vm339, %v340, %v338
          %v342 = vadd.f32 %v341, 1e-30
          %v343 = vrcp.pop %v342
          %v344 = vmul.f32 %v324, %v343
          loop: start=0, step=1, limit=8
          $region36: #{tpu_custom_call.1} parent=32 // loop_pre_header
            _
          $region37: #{tpu_custom_call.1} parent=32 // loop_header
            %s346 = sphi 0, %s350
            %p347 = scmp.ge.s32.totalorder %s346, 8
            %v351 = vphi %v344, %v498
            %v352 = vphi %v171, %v571
          $region38: #{tpu_custom_call.1} parent=32 // loop_header_branch
            %349 = sbr.rel (%p347) target = $region42
          $region39: #{tpu_custom_call.1} parent=32 // loop_body
            %v354 = vsel %vm185, %v352, 0
            %356 = vmatprep.subr.mxu0 0.0
            %357 = vmatpush1.msra.mxu0 %v351
            %358 = vmatprep.subr.mxu0 0.0
            %359 = vmatpush1.msra.mxu0 0.0
            %360 = vmatprep.subr.mxu0 0.0
            %361 = vmatpush1.msra.mxu0 0.0
            %362 = vmatprep.subr.mxu0 0.0
            %363 = vmatpush1.msra.mxu0 0.0
            %364 = vmatprep.subr.mxu0 0.0
            %365 = vmatpush1.msra.mxu0 0.0
            %366 = vmatprep.subr.mxu0 0.0
            %367 = vmatpush1.msra.mxu0 0.0
            %368 = vmatprep.subr.mxu0 0.0
            %369 = vmatpush1.msra.mxu0 0.0
            %370 = vmatprep.subr.mxu0 0.0
            %371 = vmatpush1.msra.mxu0 0.0
            %372 = vmatprep.subr.mxu0 0.0
            %373 = vmatpush1.msra.mxu0 0.0
            %374 = vmatprep.subr.mxu0 0.0
            %375 = vmatpush1.msra.mxu0 0.0
            %376 = vmatprep.subr.mxu0 0.0
            %377 = vmatpush1.msra.mxu0 0.0
            %378 = vmatprep.subr.mxu0 0.0
            %379 = vmatpush1.msra.mxu0 0.0
            %380 = vmatprep.subr.mxu0 0.0
            %381 = vmatpush1.msra.mxu0 0.0
            %382 = vmatprep.subr.mxu0 0.0
            %383 = vmatpush1.msra.mxu0 0.0
            %384 = vmatprep.subr.mxu0 0.0
            %385 = vmatpush1.msra.mxu0 0.0
            %386 = vmatprep.subr.mxu0 0.0
            %387 = vmatpush1.msra.mxu0 0.0
            %388 = vmatprep.subr.mxu0 0.0
            %389 = vmatpush1.msra.mxu0 0.0
            %390 = vmatprep.subr.mxu0 0.0
            %391 = vmatpush1.msra.mxu0 0.0
            %392 = vmatprep.subr.mxu0 0.0
            %393 = vmatpush1.msra.mxu0 0.0
            %394 = vmatprep.subr.mxu0 0.0
            %395 = vmatpush1.msra.mxu0 0.0
            %396 = vmatprep.subr.mxu0 0.0
            %397 = vmatpush1.msra.mxu0 0.0
            %398 = vmatprep.subr.mxu0 0.0
            %399 = vmatpush1.msra.mxu0 0.0
            %400 = vmatprep.subr.mxu0 0.0
            %401 = vmatpush1.msra.mxu0 0.0
            %402 = vmatprep.subr.mxu0 0.0
            %403 = vmatpush1.msra.mxu0 0.0
            %404 = vmatprep.subr.mxu0 0.0
            %405 = vmatpush1.msra.mxu0 0.0
            %406 = vmatprep.subr.mxu0 0.0
            %407 = vmatpush1.msra.mxu0 0.0
            %408 = vmatprep.subr.mxu0 0.0
            %409 = vmatpush1.msra.mxu0 0.0
            %410 = vmatprep.subr.mxu0 0.0
            %411 = vmatpush1.msra.mxu0 0.0
            %412 = vmatprep.subr.mxu0 0.0
            %413 = vmatpush1.msra.mxu0 0.0
            %414 = vmatprep.subr.mxu0 0.0
            %415 = vmatpush1.msra.mxu0 0.0
            %416 = vmatprep.subr.mxu0 0.0
            %417 = vmatpush1.msra.mxu0 0.0
            %418 = vmatprep.subr.mxu0 0.0
            %419 = vmatpush1.msra.mxu0 0.0
            %420 = vmatprep.mubr.f32.mxu0 0.0
            %421 = vmatmul.mubr.f32.gmra.mrb[0].mxu0 %v354
            %v422 = vpop.f32.mrb[0].mxu0
            %v423 = vadd.f32 0.0, %v422
            %v424 = vpop.f32.mrb[0].mxu0
            %425 = vdwg.mxu0
            %v426 = vmul.f32 %v423, 0.5
            %v427 = vsub.f32 %v172, %v426
            %v429 = vsel %vm185, %v351, 0
            %431 = vmatprep.subr.mxu0 0.0
            %432 = vmatpush1.msra.mxu0 %v427
            %433 = vmatprep.subr.mxu0 0.0
            %434 = vmatpush1.msra.mxu0 0.0
            %435 = vmatprep.subr.mxu0 0.0
            %436 = vmatpush1.msra.mxu0 0.0
            %437 = vmatprep.subr.mxu0 0.0
            %438 = vmatpush1.msra.mxu0 0.0
            %439 = vmatprep.subr.mxu0 0.0
            %440 = vmatpush1.msra.mxu0 0.0
            %441 = vmatprep.subr.mxu0 0.0
            %442 = vmatpush1.msra.mxu0 0.0
            %443 = vmatprep.subr.mxu0 0.0
            %444 = vmatpush1.msra.mxu0 0.0
            %445 = vmatprep.subr.mxu0 0.0
            %446 = vmatpush1.msra.mxu0 0.0
            %447 = vmatprep.subr.mxu0 0.0
            %448 = vmatpush1.msra.mxu0 0.0
            %449 = vmatprep.subr.mxu0 0.0
            %450 = vmatpush1.msra.mxu0 0.0
            %451 = vmatprep.subr.mxu0 0.0
            %452 = vmatpush1.msra.mxu0 0.0
            %453 = vmatprep.subr.mxu0 0.0
            %454 = vmatpush1.msra.mxu0 0.0
            %455 = vmatprep.subr.mxu0 0.0
            %456 = vmatpush1.msra.mxu0 0.0
            %457 = vmatprep.subr.mxu0 0.0
            %458 = vmatpush1.msra.mxu0 0.0
            %459 = vmatprep.subr.mxu0 0.0
            %460 = vmatpush1.msra.mxu0 0.0
            %461 = vmatprep.subr.mxu0 0.0
            %462 = vmatpush1.msra.mxu0 0.0
            %463 = vmatprep.subr.mxu0 0.0
            %464 = vmatpush1.msra.mxu0 0.0
            %465 = vmatprep.subr.mxu0 0.0
            %466 = vmatpush1.msra.mxu0 0.0
            %467 = vmatprep.subr.mxu0 0.0
            %468 = vmatpush1.msra.mxu0 0.0
            %469 = vmatprep.subr.mxu0 0.0
            %470 = vmatpush1.msra.mxu0 0.0
            %471 = vmatprep.subr.mxu0 0.0
            %472 = vmatpush1.msra.mxu0 0.0
            %473 = vmatprep.subr.mxu0 0.0
            %474 = vmatpush1.msra.mxu0 0.0
            %475 = vmatprep.subr.mxu0 0.0
            %476 = vmatpush1.msra.mxu0 0.0
            %477 = vmatprep.subr.mxu0 0.0
            %478 = vmatpush1.msra.mxu0 0.0
            %479 = vmatprep.subr.mxu0 0.0
            %480 = vmatpush1.msra.mxu0 0.0
            %481 = vmatprep.subr.mxu0 0.0
            %482 = vmatpush1.msra.mxu0 0.0
            %483 = vmatprep.subr.mxu0 0.0
            %484 = vmatpush1.msra.mxu0 0.0
            %485 = vmatprep.subr.mxu0 0.0
            %486 = vmatpush1.msra.mxu0 0.0
            %487 = vmatprep.subr.mxu0 0.0
            %488 = vmatpush1.msra.mxu0 0.0
            %489 = vmatprep.subr.mxu0 0.0
            %490 = vmatpush1.msra.mxu0 0.0
            %491 = vmatprep.subr.mxu0 0.0
            %492 = vmatpush1.msra.mxu0 0.0
            %493 = vmatprep.subr.mxu0 0.0
            %494 = vmatpush1.msra.mxu0 0.0
            %495 = vmatprep.mubr.f32.mxu0 0.0
            %496 = vmatmul.mubr.f32.gmra.mrb[0].mxu0 %v429
            %v497 = vpop.f32.mrb[0].mxu0
            %v498 = vadd.f32 0.0, %v497
            %v499 = vpop.f32.mrb[0].mxu0
            %500 = vdwg.mxu0
            %v502 = vsel %vm185, %v427, 0
            %504 = vmatprep.subr.mxu0 0.0
            %505 = vmatpush1.msra.mxu0 %v352
            %506 = vmatprep.subr.mxu0 0.0
            %507 = vmatpush1.msra.mxu0 0.0
            %508 = vmatprep.subr.mxu0 0.0
            %509 = vmatpush1.msra.mxu0 0.0
            %510 = vmatprep.subr.mxu0 0.0
            %511 = vmatpush1.msra.mxu0 0.0
            %512 = vmatprep.subr.mxu0 0.0
            %513 = vmatpush1.msra.mxu0 0.0
            %514 = vmatprep.subr.mxu0 0.0
            %515 = vmatpush1.msra.mxu0 0.0
            %516 = vmatprep.subr.mxu0 0.0
            %517 = vmatpush1.msra.mxu0 0.0
            %518 = vmatprep.subr.mxu0 0.0
            %519 = vmatpush1.msra.mxu0 0.0
            %520 = vmatprep.subr.mxu0 0.0
            %521 = vmatpush1.msra.mxu0 0.0
            %522 = vmatprep.subr.mxu0 0.0
            %523 = vmatpush1.msra.mxu0 0.0
            %524 = vmatprep.subr.mxu0 0.0
            %525 = vmatpush1.msra.mxu0 0.0
            %526 = vmatprep.subr.mxu0 0.0
            %527 = vmatpush1.msra.mxu0 0.0
            %528 = vmatprep.subr.mxu0 0.0
            %529 = vmatpush1.msra.mxu0 0.0
            %530 = vmatprep.subr.mxu0 0.0
            %531 = vmatpush1.msra.mxu0 0.0
            %532 = vmatprep.subr.mxu0 0.0
            %533 = vmatpush1.msra.mxu0 0.0
            %534 = vmatprep.subr.mxu0 0.0
            %535 = vmatpush1.msra.mxu0 0.0
            %536 = vmatprep.subr.mxu0 0.0
            %537 = vmatpush1.msra.mxu0 0.0
            %538 = vmatprep.subr.mxu0 0.0
            %539 = vmatpush1.msra.mxu0 0.0
            %540 = vmatprep.subr.mxu0 0.0
            %541 = vmatpush1.msra.mxu0 0.0
            %542 = vmatprep.subr.mxu0 0.0
            %543 = vmatpush1.msra.mxu0 0.0
            %544 = vmatprep.subr.mxu0 0.0
            %545 = vmatpush1.msra.mxu0 0.0
            %546 = vmatprep.subr.mxu0 0.0
            %547 = vmatpush1.msra.mxu0 0.0
            %548 = vmatprep.subr.mxu0 0.0
            %549 = vmatpush1.msra.mxu0 0.0
            %550 = vmatprep.subr.mxu0 0.0
            %551 = vmatpush1.msra.mxu0 0.0
            %552 = vmatprep.subr.mxu0 0.0
            %553 = vmatpush1.msra.mxu0 0.0
            %554 = vmatprep.subr.mxu0 0.0
            %555 = vmatpush1.msra.mxu0 0.0
            %556 = vmatprep.subr.mxu0 0.0
            %557 = vmatpush1.msra.mxu0 0.0
            %558 = vmatprep.subr.mxu0 0.0
            %559 = vmatpush1.msra.mxu0 0.0
            %560 = vmatprep.subr.mxu0 0.0
            %561 = vmatpush1.msra.mxu0 0.0
            %562 = vmatprep.subr.mxu0 0.0
            %563 = vmatpush1.msra.mxu0 0.0
            %564 = vmatprep.subr.mxu0 0.0
            %565 = vmatpush1.msra.mxu0 0.0
            %566 = vmatprep.subr.mxu0 0.0
            %567 = vmatpush1.msra.mxu0 0.0
            %568 = vmatprep.mubr.f32.mxu0 0.0
            %569 = vmatmul.mubr.f32.gmra.mrb[0].mxu0 %v502
            %v570 = vpop.f32.mrb[0].mxu0
            %v571 = vadd.f32 0.0, %v570
            %v572 = vpop.f32.mrb[0].mxu0
            %573 = vdwg.mxu0
          $region40: #{tpu_custom_call.1} parent=32 // loop_footer
            %s350 = sadd.s32 1, %s346
          $region41: #{tpu_custom_call.1} parent=32 // loop_footer_branch
            %345 = sbr.rel target = $region37
          $region42: #{tpu_custom_call.1} parent=32 // loop_exit
            _
          %v574 = vrsqrt.pop %v342
          %v575 = vmul.f32 %v352, %v574
          %v576 = vsub.f32 %v324, %v175
          %v577 = vmul.f32 %v576, %v576
          %v578 = vsel %vm185, %v577, 0.0
          %579 = vadd.xlane.f32.xlu0 %v578
          %v580 = vpop.xlane.xlu0 %579
          %v581 = vrot.slane %v580, 4
          %v582 = vadd.f32 %v580, %v581
          %v583 = vrot.slane %v582, 2
          %v584 = vadd.f32 %v582, %v583
          %v585 = vrot.slane %v584, 1
          %v586 = vadd.f32 %v584, %v585
          %v587 = vadd.f32 %v586, 0.0
          %s588 = vtos %v587
          %v589 = vmul.f32 %v175, %v175
          %v590 = vsel %vm185, %v589, 0.0
          %591 = vadd.xlane.f32.xlu0 %v590
          %v592 = vpop.xlane.xlu0 %591
          %v593 = vrot.slane %v592, 4
          %v594 = vadd.f32 %v592, %v593
          %v595 = vrot.slane %v594, 2
          %v596 = vadd.f32 %v594, %v595
          %v597 = vrot.slane %v596, 1
          %v598 = vadd.f32 %v596, %v597
          %v599 = vadd.f32 %v598, 0.0
          %s600 = vtos %v599
          %s601 = smul.f32 %s600, 1e-12
          %p602 = scmp.lt.f32.partialorder %s588, %s601
          %s603 = scalar_select %p602, 1, 0
          %s604 = sadd.s32 %s174, 1
        $region33: #{tpu_custom_call.1} parent=27 // loop_footer
          _
        $region34: #{tpu_custom_call.1} parent=27 // loop_footer_branch
          %173 = sbr.rel target = $region30
        $region35: #{tpu_custom_call.1} parent=27 // loop_exit
          _
        %vm605 = vcmask 64512
        %606 = vst.msk [vmem:[%s149] sm:$0xff] %vm605, %v175
        %s607 = sand.u32 %s76, 1
        %s608 = scalar_lea.sflag [#allocation3], %s607
        %s609 = sand.u32 %s76, 1
        %s610 = smul.addr %s609, 8
        %s611 = scalar_lea.vmem [#allocation2], %s610
        // Predicated region
        $region43: #{tpu_custom_call.1} parent=27 // pred_check
          %p612 = pneg %p86
        $region44: #{tpu_custom_call.1} parent=27 // pred_check_branch
          %614 = sbr.rel (%p612) target = $region46
        $region45: #{tpu_custom_call.1} parent=27 // pred_region
          %s616 = ssub.s32 128, 128
          %617 = vsyncadd %s608, %s616
          %s618 = smul.addr %s16, 128
          %s619 = scalar_lea.hbm %s2, %s618
          %s621 = sshll.u32 %s611, 4
          %s622 = int_to_ptr.vmem [resolvable:$true] %s621
          %624 = dma.vmem_to_hbm [thread:$0]  %s622, 128, %s619, %s608
        $region46: #{tpu_custom_call.1} parent=27 // pred_fallthru
          _
      $region28: #{tpu_custom_call.1} parent=5 // pred_fallthru
        _
      %p625 = scmp.le.s32.totalorder 2, %s11
      // Predicated region
      $region47: #{tpu_custom_call.1} parent=5 // pred_check
        %p626 = pneg %p625
      $region48: #{tpu_custom_call.1} parent=5 // pred_check_branch
        %628 = sbr.rel (%p626) target = $region50
      $region49: #{tpu_custom_call.1} parent=5 // pred_region
        %s629 = ssub.s32 %s11, 2
        // Predicated region
        $region51: #{tpu_custom_call.1} parent=49 // pred_check
          %p630 = pneg %p92
        $region52: #{tpu_custom_call.1} parent=49 // pred_check_branch
          %632 = sbr.rel (%p630) target = $region54
        $region53: #{tpu_custom_call.1} parent=49 // pred_region
          %s633 = sand.u32 %s77, 1
          %s634 = scalar_lea.sflag [#allocation3], %s633
          %s635 = sand.u32 %s77, 1
          %s636 = smul.addr %s635, 8
          %s637 = scalar_lea.vmem [#allocation2], %s636
          %638 = dma.done %s634, 128
        $region54: #{tpu_custom_call.1} parent=49 // pred_fallthru
          _
      $region50: #{tpu_custom_call.1} parent=5 // pred_fallthru
        _
    $region6: #{tpu_custom_call.1} parent=1 // loop_footer
      %s15 = sadd.s32 1, %s11
    $region7: #{tpu_custom_call.1} parent=1 // loop_footer_branch
      %10 = sbr.rel target = $region3
    $region8: #{tpu_custom_call.1} parent=1 // loop_exit
      _
    %639 = vsyncpa [#allocation3], 1
    %s640 = scalar_lea.sflag [#allocation3], 1
    %641 = vsyncpa %s640, 1

</llo_original>
